<compile_context>
chip_gen: v5e
topology: v5e:2x2
jax: 0.10.0
libtpu: 0.0.40
codegen_flags: <defaults>
</compile_context>

<pallas_src>
import jax
import jax.numpy as jnp
from jax.experimental import pallas as pl
from jax.experimental.pallas import tpu as pltpu


def mlp_kernel(x_ref, w1_ref, b1_ref, w2_ref, b2_ref, o_ref):
    # Cast x to bf16 right before the MXU (free on the VPU; kernel is
    # DMA-bound).  Both dots accumulate in f32; biases are added in f32.
    x = x_ref[...].astype(jnp.bfloat16)
    h = jnp.dot(x, w1_ref[...], preferred_element_type=jnp.float32)
    h = jnp.maximum(h + b1_ref[...], 0.0)
    out = jnp.dot(h.astype(jnp.bfloat16), w2_ref[...],
                  preferred_element_type=jnp.float32)
    o_ref[...] = (out + b2_ref[...]).astype(o_ref.dtype)


def _round_up(n, m):
    return ((n + m - 1) // m) * m


def _pad2(a, rows, cols):
    r, c = a.shape
    if r == rows and c == cols:
        return a
    return jnp.pad(a, ((0, rows - r), (0, cols - c)))


def nn_forward(x, w1, b1, w2, b2, *, block_rows=1024):
    """Pallas MLP forward: relu(x @ w1 + b1) @ w2 + b2.

    Weights are stored pre-transposed as (in_features, out_features).
    Only the hidden dim is padded (to 128) -- x, the output, and the outer
    feature dims stay at their natural sizes (full-array block dims).
    NOTE: x/W1/W2 feed the MXU as bfloat16 with f32 accumulation (documented
    precision contract vs. the pure-f32 PyTorch module).
    """
    batch, n_input = x.shape
    hidden = w1.shape[1]
    n_output = w2.shape[1]
    hid_p = _round_up(hidden, 128)

    # Tiny, resident operands: pad hidden dim to 128 lanes, cast weights once.
    w1_p = _pad2(w1, n_input, hid_p).astype(jnp.bfloat16)
    w2_p = _pad2(w2, hid_p, n_output).astype(jnp.bfloat16)
    b1_p = _pad2(b1.reshape(1, -1), 1, hid_p).astype(jnp.float32)
    b2_p = b2.reshape(1, -1).astype(jnp.float32)

    out_shape = jax.ShapeDtypeStruct((batch, n_output), jnp.float32)

    if batch <= block_rows:
        # Single-block case: no grid -> no software-pipeline overhead; all
        # arrays resident in VMEM at their natural shapes.
        vmem = pl.BlockSpec(memory_space=pltpu.MemorySpace.VMEM)
        return pl.pallas_call(
            mlp_kernel,
            out_shape=out_shape,
            in_specs=[vmem] * 5,
            out_specs=vmem,
        )(x, w1_p, b1_p, w2_p, b2_p)

    # Row-tiled grid over the batch; weights/biases fully resident.
    # Balance the grid to an even block count (v7x: 2 TensorCores share the
    # "parallel" batch axis), keeping block_rows a multiple of 8 (f32 sublane).
    num_blocks = pl.cdiv(batch, block_rows)
    if num_blocks % 2 == 1:
        num_blocks += 1
    block_rows = _round_up(pl.cdiv(batch, num_blocks), 8)
    num_blocks = pl.cdiv(batch, block_rows)  # Pallas masks the ragged tail.

    flops = 2 * batch * (n_input * hid_p + hid_p * n_output)
    bytes_accessed = (x.size * x.dtype.itemsize          # x read
                      + batch * n_output * 4             # output write
                      + (w1_p.size + w2_p.size) * 2      # bf16 weights
                      + (hid_p + n_output) * 4)          # f32 biases

    return pl.pallas_call(
        mlp_kernel,
        out_shape=out_shape,
        grid=(num_blocks,),
        in_specs=[
            pl.BlockSpec((block_rows, n_input), lambda i: (i, 0)),
            pl.BlockSpec((n_input, hid_p), lambda i: (0, 0)),
            pl.BlockSpec((1, hid_p), lambda i: (0, 0)),
            pl.BlockSpec((hid_p, n_output), lambda i: (0, 0)),
            pl.BlockSpec((1, n_output), lambda i: (0, 0)),
        ],
        out_specs=pl.BlockSpec((block_rows, n_output), lambda i: (i, 0)),
        compiler_params=pltpu.CompilerParams(
            dimension_semantics=("parallel",)),
        cost_estimate=pl.CostEstimate(
            flops=flops, transcendentals=0, bytes_accessed=bytes_accessed),
    )(x, w1_p, b1_p, w2_p, b2_p)


if __name__ == "__main__":
    # Hyperparameters implied by the module: n_input, hidden_units, n_output.
    n_input, hidden_units, n_output = 32, 64, 16

    key = jax.random.PRNGKey(0)
    kx, kw1, kb1, kw2, kb2, kx2 = jax.random.split(key, 6)

    # Linear weights stored pre-transposed: (in_features, out_features).
    w1 = jax.random.normal(kw1, (n_input, hidden_units), jnp.float32) * 0.1
    b1 = jax.random.normal(kb1, (hidden_units,), jnp.float32) * 0.1
    w2 = jax.random.normal(kw2, (hidden_units, n_output), jnp.float32) * 0.1
    b2 = jax.random.normal(kb2, (n_output,), jnp.float32) * 0.1

    def ref_fwd(x):
        # Reference with the same bf16-operand / f32-accumulation contract.
        xb = x.astype(jnp.bfloat16)
        w1b = w1.astype(jnp.bfloat16)
        w2b = w2.astype(jnp.bfloat16)
        h = jnp.maximum(
            jnp.dot(xb, w1b, preferred_element_type=jnp.float32)
            + b1.reshape(1, -1), 0.0)
        return (jnp.dot(h.astype(jnp.bfloat16), w2b,
                        preferred_element_type=jnp.float32)
                + b2.reshape(1, -1))

    # Small batch -> grid-free single-block path (no padding at all).
    x_small = jax.random.normal(kx, (8, n_input), jnp.float32)
    out_small = jax.block_until_ready(nn_forward(x_small, w1, b1, w2, b2))
    assert out_small.shape == (8, n_output)
    assert jnp.allclose(out_small, ref_fwd(x_small), atol=2e-2, rtol=2e-2)

    # Larger batch with a small block_rows to exercise the gridded path:
    # 600 rows / block_rows=128 -> balanced even grid of 6 blocks of 104 rows,
    # ragged last block handled by Pallas masking (no row padding).
    x_big = jax.random.normal(kx2, (600, n_input), jnp.float32)
    out_big = jax.block_until_ready(
        nn_forward(x_big, w1, b1, w2, b2, block_rows=128))
    assert out_big.shape == (600, n_output)
    assert jnp.allclose(out_big, ref_fwd(x_big), atol=2e-2, rtol=2e-2)

    print("KERNEL_OK")
</pallas_src>

<mosaic_0001>
module attributes {stable_mosaic.version = 11 : i64} {
  func.func @mlp_kernel(%arg0: memref<8x32xf32, #tpu.memory_space<vmem>>, %arg1: memref<32x128xbf16, #tpu.memory_space<vmem>>, %arg2: memref<1x128xf32, #tpu.memory_space<vmem>>, %arg3: memref<128x16xbf16, #tpu.memory_space<vmem>>, %arg4: memref<1x16xf32, #tpu.memory_space<vmem>>, %arg5: memref<8x16xf32, #tpu.memory_space<vmem>>) attributes {dimension_semantics = [], scalar_prefetch = 0 : i64, scratch_operands = 0 : i64, tpu.core_type = #tpu.core_type<tc>} {
    %c0 = arith.constant 0 : index
    %c0_0 = arith.constant 0 : index
    %0 = vector.load %arg0[%c0, %c0_0] : memref<8x32xf32, #tpu.memory_space<vmem>>, vector<8x32xf32>
    %1 = arith.truncf %0 : vector<8x32xf32> to vector<8x32xbf16>
    %c0_1 = arith.constant 0 : index
    %c0_2 = arith.constant 0 : index
    %2 = vector.load %arg1[%c0_1, %c0_2] : memref<32x128xbf16, #tpu.memory_space<vmem>>, vector<32x128xbf16>
    %cst = arith.constant dense<0.000000e+00> : vector<8x128xf32>
    %3 = tpu.matmul %1, %2, %cst {dimension_numbers = #tpu.dot_dimension_numbers<[1], [0], [0], [1], [0, 0, 1, 1], [], []>} : vector<8x32xbf16>, vector<32x128xbf16>, vector<8x128xf32> -> vector<8x128xf32>
    %c0_3 = arith.constant 0 : index
    %c0_4 = arith.constant 0 : index
    %4 = vector.load %arg2[%c0_3, %c0_4] : memref<1x128xf32, #tpu.memory_space<vmem>>, vector<1x128xf32>
    %5 = vector.broadcast %4 : vector<1x128xf32> to vector<8x128xf32>
    %6 = arith.addf %3, %5 : vector<8x128xf32>
    %cst_5 = arith.constant 0.000000e+00 : f32
    %7 = vector.broadcast %cst_5 : f32 to vector<8x128xf32>
    %8 = arith.maximumf %6, %7 : vector<8x128xf32>
    %9 = arith.truncf %8 : vector<8x128xf32> to vector<8x128xbf16>
    %c0_6 = arith.constant 0 : index
    %c0_7 = arith.constant 0 : index
    %10 = vector.load %arg3[%c0_6, %c0_7] : memref<128x16xbf16, #tpu.memory_space<vmem>>, vector<128x16xbf16>
    %cst_8 = arith.constant dense<0.000000e+00> : vector<8x16xf32>
    %11 = tpu.matmul %9, %10, %cst_8 {dimension_numbers = #tpu.dot_dimension_numbers<[1], [0], [0], [1], [0, 0, 1, 1], [], []>} : vector<8x128xbf16>, vector<128x16xbf16>, vector<8x16xf32> -> vector<8x16xf32>
    %c0_9 = arith.constant 0 : index
    %c0_10 = arith.constant 0 : index
    %12 = vector.load %arg4[%c0_9, %c0_10] : memref<1x16xf32, #tpu.memory_space<vmem>>, vector<1x16xf32>
    %13 = vector.broadcast %12 : vector<1x16xf32> to vector<8x16xf32>
    %14 = arith.addf %11, %13 : vector<8x16xf32>
    %c0_11 = arith.constant 0 : index
    %c0_12 = arith.constant 0 : index
    %15 = vector.load %arg5[%c0_11, %c0_12] : memref<8x16xf32, #tpu.memory_space<vmem>>, vector<8x16xf32>
    tpu.vector_store %arg5[%c0_11, %c0_12], %14 {strides = array<i32>} : memref<8x16xf32, #tpu.memory_space<vmem>>, vector<8x16xf32>,
    return
  }
}

</mosaic_0001>

<llo_original>
// kernel: tpu_custom_call.1
$region0: #{tpu_custom_call.1}
  #allocation0 [shape = 'u32[]', space=smem, size = 0x4, offset = 0x4, fixed_abs, tag = 'smem constant byte address 0x4 - core index']
  #allocation1 [shape = 'u32[72,128]{1,0:T(1,128)}', space=vmem, size = 0x9000, scoped, tag = 'internal scratch']
  %s0 = inlined_call_operand.vmem [shape: f32[8,32], index: 0, kind: input, shape index: {}]
  %s1 = inlined_call_operand.vmem [shape: bf16[32,128], index: 1, kind: input, shape index: {}]
  %s2 = inlined_call_operand.vmem [shape: f32[1,128], index: 2, kind: input, shape index: {}]
  %s3 = inlined_call_operand.vmem [shape: bf16[128,16], index: 3, kind: input, shape index: {}]
  %s4 = inlined_call_operand.vmem [shape: f32[1,16], index: 4, kind: input, shape index: {}]
  %s5 = inlined_call_operand.hbm [shape: f32[8,16], index: 5, kind: output, shape index: {}]
  %s6 = sld [smem:[#allocation0]]
  $region30: #{tpu_custom_call.1} parent=0
    _
  %s8 = ssub.s32 1, %s6
  %s9 = scalar_select 0, %s8, %s6
  $region1: #{tpu_custom_call.1} parent=0
    #allocation2 [shape = 'u8[4096]{0}', space=vmem, size = 0x1000, scoped, tag = 'output window, operand 0, single buffered']
    #allocation3 [shape = 's32[1]{0}', space=sflag, size = 0x4, scoped, tag = 'scoped memory for tpu_custom_call.1']
    %10 = vsyncpa [#allocation3], 0
    // Predicated region
    $region2: #{tpu_custom_call.1} parent=1 // pred_check
      _
    $region3: #{tpu_custom_call.1} parent=1 // pred_check_branch
      %12 = sbr.rel (0) target = $region5
    $region4: #{tpu_custom_call.1} parent=1 // pred_region
      _
    $region5: #{tpu_custom_call.1} parent=1 // pred_fallthru
      _
    // Predicated region
    $region6: #{tpu_custom_call.1} parent=1 // pred_check
      _
    $region7: #{tpu_custom_call.1} parent=1 // pred_check_branch
      %14 = sbr.rel (0) target = $region9
    $region8: #{tpu_custom_call.1} parent=1 // pred_region
      _
    $region9: #{tpu_custom_call.1} parent=1 // pred_fallthru
      _
    // Predicated region
    $region10: #{tpu_custom_call.1} parent=1 // pred_check
      _
    $region11: #{tpu_custom_call.1} parent=1 // pred_check_branch
      %16 = sbr.rel (0) target = $region13
    $region12: #{tpu_custom_call.1} parent=1 // pred_region
      _
    $region13: #{tpu_custom_call.1} parent=1 // pred_fallthru
      _
    // Predicated region
    $region14: #{tpu_custom_call.1} parent=1 // pred_check
      _
    $region15: #{tpu_custom_call.1} parent=1 // pred_check_branch
      %18 = sbr.rel (0) target = $region17
    $region16: #{tpu_custom_call.1} parent=1 // pred_region
      _
    $region17: #{tpu_custom_call.1} parent=1 // pred_fallthru
      _
    // Predicated region
    $region18: #{tpu_custom_call.1} parent=1 // pred_check
      _
    $region19: #{tpu_custom_call.1} parent=1 // pred_check_branch
      %20 = sbr.rel (0) target = $region21
    $region20: #{tpu_custom_call.1} parent=1 // pred_region
      _
    $region21: #{tpu_custom_call.1} parent=1 // pred_fallthru
      _
    %v22 = vld [vmem:[%s0] sm:$0xff]
    %v23 = vpack.c.bf16 %v22, %v22
    %v24 = vld [vmem:[%s1] sm:$0xf]
    %v25 = vld [vmem:[%s1 + $0x4] sm:$0xf]
    %v26 = vld [vmem:[%s1 + $0x8] sm:$0xf]
    %v27 = vld [vmem:[%s1 + $0xc] sm:$0xf]
    %v28 = vld [vmem:[%s2] sm:$0x1]
    %v30 = vperm.slane %v28, 0
    %v36 = vunpack.c.l.b16 %v24
    %v37 = vunpack.c.l.b16 %v25
    %v38 = vunpack.c.l.b16 %v26
    %v39 = vunpack.c.l.b16 %v27
    %v40 = vpack.c.b16 %v37, %v36
    %v41 = vpack.c.b16 %v39, %v38
    %vm44 = vcmask 261120
    %v46 = vsel %vm44, %v23, 0
    %48 = vmatpush.bf16.msra.mxu0 0
    %49 = vmatpush.bf16.msra.mxu0 0
    %50 = vmatpush.bf16.msra.mxu0 0
    %51 = vmatpush.bf16.msra.mxu0 0
    %52 = vmatpush.bf16.msra.mxu0 0
    %53 = vmatpush.bf16.msra.mxu0 0
    %54 = vmatpush.bf16.msra.mxu0 %v41
    %55 = vmatpush.bf16.msra.mxu0 %v40
    %56 = vmatmul.bf16.gmra.mxu0 %v46
    %v57 = vpop.f32.mrf.mxu0
    %v58 = vadd.f32 %v30, %v57
    %v59 = vpop.f32.mrf.mxu0
    %60 = vdwg.mxu0
    %v61 = vmax.f32 %v58, 0.0
    %v62 = vpack.c.bf16 %v61, %v61
    %v63 = vld [vmem:[%s3] sm:$0xf]
    %v64 = vld [vmem:[%s3 + $0x4] sm:$0xf]
    %v65 = vld [vmem:[%s3 + $0x8] sm:$0xf]
    %v66 = vld [vmem:[%s3 + $0xc] sm:$0xf]
    %v67 = vld [vmem:[%s3 + $0x10] sm:$0xf]
    %v68 = vld [vmem:[%s3 + $0x14] sm:$0xf]
    %v69 = vld [vmem:[%s3 + $0x18] sm:$0xf]
    %v70 = vld [vmem:[%s3 + $0x1c] sm:$0xf]
    %v71 = vld [vmem:[%s3 + $0x20] sm:$0xf]
    %v72 = vld [vmem:[%s3 + $0x24] sm:$0xf]
    %v73 = vld [vmem:[%s3 + $0x28] sm:$0xf]
    %v74 = vld [vmem:[%s3 + $0x2c] sm:$0xf]
    %v75 = vld [vmem:[%s3 + $0x30] sm:$0xf]
    %v76 = vld [vmem:[%s3 + $0x34] sm:$0xf]
    %v77 = vld [vmem:[%s3 + $0x38] sm:$0xf]
    %v78 = vld [vmem:[%s3 + $0x3c] sm:$0xf]
    %v79 = vld [vmem:[%s4] sm:$0x1]
    %v81 = vperm.slane %v79, 0
    %v99 = vunpack.c.l.b16 %v63
    %v100 = vunpack.c.l.b16 %v64
    %v101 = vunpack.c.l.b16 %v65
    %v102 = vunpack.c.l.b16 %v66
    %v103 = vunpack.c.l.b16 %v67
    %v104 = vunpack.c.l.b16 %v68
    %v105 = vunpack.c.l.b16 %v69
    %v106 = vunpack.c.l.b16 %v70
    %v107 = vunpack.c.l.b16 %v71
    %v108 = vunpack.c.l.b16 %v72
    %v109 = vunpack.c.l.b16 %v73
    %v110 = vunpack.c.l.b16 %v74
    %v111 = vunpack.c.l.b16 %v75
    %v112 = vunpack.c.l.b16 %v76
    %v113 = vunpack.c.l.b16 %v77
    %v114 = vunpack.c.l.b16 %v78
    %v115 = vpack.c.b16 %v100, %v99
    %v116 = vpack.c.b16 %v102, %v101
    %v117 = vpack.c.b16 %v104, %v103
    %v118 = vpack.c.b16 %v106, %v105
    %v119 = vpack.c.b16 %v108, %v107
    %v120 = vpack.c.b16 %v110, %v109
    %v121 = vpack.c.b16 %v112, %v111
    %v122 = vpack.c.b16 %v114, %v113
    %131 = vmatpush.bf16.msra.mxu0 %v122
    %132 = vmatpush.bf16.msra.mxu0 %v121
    %133 = vmatpush.bf16.msra.mxu0 %v120
    %134 = vmatpush.bf16.msra.mxu0 %v119
    %135 = vmatpush.bf16.msra.mxu0 %v118
    %136 = vmatpush.bf16.msra.mxu0 %v117
    %137 = vmatpush.bf16.msra.mxu0 %v116
    %138 = vmatpush.bf16.msra.mxu0 %v115
    %139 = vmatmul.bf16.gmra.mxu0 %v62
    %v140 = vpop.f32.mrf.mxu0
    %v141 = vadd.f32 %v81, %v140
    %v142 = vpop.f32.mrf.mxu0
    %143 = vdwg.mxu0
    %vm144 = vcmask 130048
    %145 = vst.msk [vmem:[#allocation2] sm:$0xff] %vm144, %v141
    // Predicated region
    $region22: #{tpu_custom_call.1} parent=1 // pred_check
      _
    $region23: #{tpu_custom_call.1} parent=1 // pred_check_branch
      %147 = sbr.rel (0) target = $region25
    $region24: #{tpu_custom_call.1} parent=1 // pred_region
      %149 = vsyncadd [#allocation3], 0
      %s151 = sshll.u32 [#allocation2], 4
      %s152 = int_to_ptr.vmem [resolvable:$true] %s151
      %s153 = sshll.u32 %s5, 4
      %s154 = int_to_ptr.hbm [resolvable:$true] %s153
      %156 = dma.vmem_to_hbm [thread:$0]  %s152, 128, %s154, [#allocation3]
    $region25: #{tpu_custom_call.1} parent=1 // pred_fallthru
      _
    // Predicated region
    $region26: #{tpu_custom_call.1} parent=1 // pred_check
      _
    $region27: #{tpu_custom_call.1} parent=1 // pred_check_branch
      %158 = sbr.rel (0) target = $region29
    $region28: #{tpu_custom_call.1} parent=1 // pred_region
      %160 = dma.done [#allocation3], 128
    $region29: #{tpu_custom_call.1} parent=1 // pred_fallthru
      _
    %161 = vsyncpa [#allocation3], 1

</llo_original>
